<compile_context>
chip_gen: v7x
topology: tpu7x:2x2x1
jax: 0.10.0
libtpu: 0.0.40
codegen_flags: <defaults>
</compile_context>

<pallas_src>
import functools

import jax
import jax.numpy as jnp
from jax.experimental import pallas as pl
from jax.experimental.pallas import tpu as pltpu

BN_EPS = 1e-5


def _round_up(n, m):
    return ((n + m - 1) // m) * m


def _pick_tile_b(batch):
    for t in (512, 256, 128, 64, 32, 16, 8):
        if batch % t == 0:
            return t
    return batch


def cluster_kernel(x_ref, w1_ref, gamma_ref, beta_ref, w2_ref, b2_ref,
                   o_ref,
                   h_ref, sum_ref, sumsq_ref, scale_ref, shift_ref,
                   *, batch_size):
    phase = pl.program_id(0)
    i = pl.program_id(1)
    tile_b = x_ref.shape[0]

    row = i * tile_b
    if tile_b % 8 == 0:
        row = pl.multiple_of(row, 8)

    @pl.when(phase == 0)
    def _phase0():
        @pl.when(i == 0)
        def _init():
            sum_ref[...] = jnp.zeros_like(sum_ref)
            sumsq_ref[...] = jnp.zeros_like(sumsq_ref)

        # Linear 1 on the MXU (bf16 inputs, f32 accumulation). No bias: a
        # per-feature bias before train-mode BatchNorm cancels exactly.
        h = jnp.dot(x_ref[...].astype(w1_ref.dtype), w1_ref[...],
                    preferred_element_type=jnp.float32)       # (tile_b, H_pad)
        h_ref[pl.ds(row, tile_b), :] = h
        # Full-batch BN statistics, accumulated across tiles in f32.
        sum_ref[...] += jnp.sum(h, axis=0, keepdims=True)
        sumsq_ref[...] += jnp.sum(h * h, axis=0, keepdims=True)

    @pl.when(phase == 1)
    def _phase1():
        @pl.when(i == 0)
        def _finalize_stats():
            inv_n = jnp.float32(1.0 / batch_size)
            mean = sum_ref[...] * inv_n
            var = jnp.maximum(sumsq_ref[...] * inv_n - mean * mean, 0.0)
            scale = gamma_ref[...] * jax.lax.rsqrt(var + BN_EPS)
            scale_ref[...] = scale
            shift_ref[...] = beta_ref[...] - mean * scale

        h = h_ref[pl.ds(row, tile_b), :]
        # Fused BN affine + ReLU: two full-(tile, H) VALU passes total.
        h_act = jnp.maximum(h * scale_ref[...] + shift_ref[...], 0.0)
        out = jnp.dot(h_act.astype(w2_ref.dtype), w2_ref[...],
                      preferred_element_type=jnp.float32)
        o_ref[...] = (out + b2_ref[...]).astype(o_ref.dtype)


def cluster_layer_forward(x, w1, b1, gamma, beta, w2, b2, *, use_bf16_mxu=True):
    """x: (B, D_in) f32. Returns (B, prototype_num) f32.

    b1 is accepted for interface parity with the PyTorch module but is NOT
    used: a bias immediately before train-mode BatchNorm cancels exactly.
    """
    del b1
    B, D_in = x.shape
    H = w1.shape[1]
    P = w2.shape[1]
    H_pad = _round_up(H, 128)
    P_pad = _round_up(P, 128)
    tile_b = _pick_tile_b(B)
    nb = B // tile_b

    mxu_dtype = jnp.bfloat16 if use_bf16_mxu else jnp.float32

    # Lane-pad H / P. Padded h columns come out exactly zero (zero w1 columns,
    # gamma padded with 0 -> scale 0); padded output columns are sliced off.
    w1_p = jnp.pad(w1, ((0, 0), (0, H_pad - H))).astype(mxu_dtype)
    gamma_p = jnp.pad(gamma, ((0, 0), (0, H_pad - H)))
    beta_p = jnp.pad(beta, ((0, 0), (0, H_pad - H)))
    w2_p = jnp.pad(w2, ((0, H_pad - H), (0, P_pad - P))).astype(mxu_dtype)
    b2_p = jnp.pad(b2, ((0, 0), (0, P_pad - P)))

    w_itemsize = jnp.dtype(mxu_dtype).itemsize
    flops = 2 * B * (D_in * H_pad + H_pad * P_pad) + 8 * B * H_pad
    bytes_accessed = (x.size * x.dtype.itemsize
                      + (w1_p.size + w2_p.size) * w_itemsize
                      + (gamma_p.size + beta_p.size + b2_p.size) * 4
                      + B * P_pad * 4)
    cost = pl.CostEstimate(flops=flops, transcendentals=H_pad,
                           bytes_accessed=bytes_accessed)

    # VMEM budget: batch-resident h + double-buffered x/out tiles + weights.
    # Cap at 48 MiB so the same tiling is safe on v7x (64 MiB physical VMEM).
    vmem_est = (B * H_pad * 4
                + 2 * tile_b * D_in * x.dtype.itemsize
                + 2 * tile_b * P_pad * 4
                + (w1_p.size + w2_p.size) * w_itemsize
                + 10 * H_pad * 4 + 2 * P_pad * 4)
    vmem_limit = int(min(max(2 * vmem_est, 4 << 20), 48 << 20))

    grid_spec = pltpu.PrefetchScalarGridSpec(
        num_scalar_prefetch=0,
        grid=(2, nb),
        in_specs=[
            # x tile: fetched per tile in phase 0, parked at block 0 in phase 1.
            pl.BlockSpec((tile_b, D_in), lambda p, i: (i * (1 - p), 0)),
            pl.BlockSpec((D_in, H_pad), lambda p, i: (0, 0)),
            pl.BlockSpec((1, H_pad), lambda p, i: (0, 0)),
            pl.BlockSpec((1, H_pad), lambda p, i: (0, 0)),
            pl.BlockSpec((H_pad, P_pad), lambda p, i: (0, 0)),
            pl.BlockSpec((1, P_pad), lambda p, i: (0, 0)),
        ],
        # Output only gets valid data in phase 1; parking phase 0 at block 0
        # keeps each block's visits consecutive -> single writeback per block.
        out_specs=pl.BlockSpec((tile_b, P_pad), lambda p, i: (i * p, 0)),
        scratch_shapes=[
            pltpu.VMEM((B, H_pad), jnp.float32),   # batch-resident h
            pltpu.VMEM((1, H_pad), jnp.float32),   # sum(h)
            pltpu.VMEM((1, H_pad), jnp.float32),   # sum(h*h)
            pltpu.VMEM((1, H_pad), jnp.float32),   # fused BN scale
            pltpu.VMEM((1, H_pad), jnp.float32),   # fused BN shift
        ],
    )

    out_padded = pl.pallas_call(
        functools.partial(cluster_kernel, batch_size=B),
        out_shape=jax.ShapeDtypeStruct((B, P_pad), jnp.float32),
        grid_spec=grid_spec,
        compiler_params=pltpu.CompilerParams(
            # Both axes carry cross-iteration state (BN accumulation / phase
            # ordering), so they must stay "arbitrary".
            # TODO(synk): on v7x, shard the batch axis across the 2 TensorCores
            # ("parallel") with a cross-core BN-stat combine in CMEM.
            dimension_semantics=("arbitrary", "arbitrary"),
            vmem_limit_bytes=vmem_limit,
        ),
        cost_estimate=cost,
    )(x, w1_p, gamma_p, beta_p, w2_p, b2_p)

    return out_padded[:, :P] if P_pad != P else out_padded


def init_params(key, input_size, hidden_size, prototype_num):
    """Deterministic PyTorch-style (Kaiming-uniform-ish) init."""
    k1, k2, k3, k4 = jax.random.split(key, 4)
    bound1 = 1.0 / jnp.sqrt(input_size)
    bound2 = 1.0 / jnp.sqrt(hidden_size)
    # stored pre-transposed: (in_features, out_features)
    w1 = jax.random.uniform(k1, (input_size, hidden_size), jnp.float32,
                            -bound1, bound1)
    b1 = jax.random.uniform(k2, (1, hidden_size), jnp.float32, -bound1, bound1)
    gamma = jnp.ones((1, hidden_size), jnp.float32)   # BN weight init
    beta = jnp.zeros((1, hidden_size), jnp.float32)   # BN bias init
    w2 = jax.random.uniform(k3, (hidden_size, prototype_num), jnp.float32,
                            -bound2, bound2)
    b2 = jax.random.uniform(k4, (1, prototype_num), jnp.float32,
                            -bound2, bound2)
    return w1, b1, gamma, beta, w2, b2


def reference_forward(x, w1, b1, gamma, beta, w2, b2):
    # Full PyTorch semantics, INCLUDING the Linear-1 bias — demonstrates that
    # dropping it inside the kernel is mathematically identical.
    h = x @ w1 + b1
    mean = jnp.mean(h, axis=0, keepdims=True)
    var = jnp.mean((h - mean) ** 2, axis=0, keepdims=True)
    h = (h - mean) / jnp.sqrt(var + BN_EPS) * gamma + beta
    h = jnp.maximum(h, 0.0)
    return h @ w2 + b2


if __name__ == "__main__":
    batch = 8
    input_size = 32
    hidden_size = 32
    prototype_num = 16

    key = jax.random.PRNGKey(0)
    kx, kp = jax.random.split(key)
    x = jax.random.normal(kx, (batch, input_size), jnp.float32)
    params = init_params(kp, input_size, hidden_size, prototype_num)
    ref = reference_forward(x, *params)

    # f32-MXU path: tight match against the reference (with b1 included).
    out_f32 = jax.block_until_ready(
        cluster_layer_forward(x, *params, use_bf16_mxu=False))
    assert out_f32.shape == (batch, prototype_num)
    assert jnp.allclose(out_f32, ref, atol=1e-4, rtol=1e-4), "f32 mismatch"

    # bf16-MXU path (the fast path on v5e/v6e/v7x): looser tolerance.
    out_bf16 = jax.block_until_ready(
        cluster_layer_forward(x, *params, use_bf16_mxu=True))
    assert out_bf16.shape == (batch, prototype_num)
    assert jnp.allclose(out_bf16, ref, atol=5e-2, rtol=5e-2), "bf16 mismatch"

    print("KERNEL_OK")
</pallas_src>

<mosaic_0001>
module attributes {stable_mosaic.version = 11 : i64} {
  func.func @cluster_kernel(%arg0: i32, %arg1: i32, %arg2: memref<8x32xf32, #tpu.memory_space<vmem>>, %arg3: memref<32x128xf32, #tpu.memory_space<vmem>>, %arg4: memref<1x128xf32, #tpu.memory_space<vmem>>, %arg5: memref<1x128xf32, #tpu.memory_space<vmem>>, %arg6: memref<128x128xf32, #tpu.memory_space<vmem>>, %arg7: memref<1x128xf32, #tpu.memory_space<vmem>>, %arg8: memref<8x128xf32, #tpu.memory_space<vmem>>, %arg9: memref<8x128xf32, #tpu.memory_space<vmem>>, %arg10: memref<1x128xf32, #tpu.memory_space<vmem>>, %arg11: memref<1x128xf32, #tpu.memory_space<vmem>>, %arg12: memref<1x128xf32, #tpu.memory_space<vmem>>, %arg13: memref<1x128xf32, #tpu.memory_space<vmem>>) attributes {dimension_semantics = [#tpu.dimension_semantics<arbitrary>, #tpu.dimension_semantics<arbitrary>], iteration_bounds = array<i64: 2, 1>, scalar_prefetch = 0 : i64, scratch_operands = 5 : i64, tpu.core_type = #tpu.core_type<tc>, window_params = [{transform_indices = @transform_0, window_bounds = array<i64: 8, 32>}, {pipeline_mode = #tpu.pipeline_mode<synchronous>, transform_indices = @transform_1, window_bounds = array<i64: 32, 128>}, {pipeline_mode = #tpu.pipeline_mode<synchronous>, transform_indices = @transform_2, window_bounds = array<i64: 1, 128>}, {pipeline_mode = #tpu.pipeline_mode<synchronous>, transform_indices = @transform_3, window_bounds = array<i64: 1, 128>}, {pipeline_mode = #tpu.pipeline_mode<synchronous>, transform_indices = @transform_4, window_bounds = array<i64: 128, 128>}, {pipeline_mode = #tpu.pipeline_mode<synchronous>, transform_indices = @transform_5, window_bounds = array<i64: 1, 128>}, {transform_indices = @transform_6, window_bounds = array<i64: 8, 128>}]} {
    %c8_i32 = arith.constant 8 : i32
    %0 = arith.muli %arg1, %c8_i32 : i32
    %1 = tpu.assume_multiple %0, 8 : i32
    %c0_i32 = arith.constant 0 : i32
    %2 = arith.cmpi eq, %arg0, %c0_i32 : i32
    %3 = arith.extui %2 : i1 to i32
    %c0_i32_0 = arith.constant 0 : i32
    %4 = arith.cmpi ne, %3, %c0_i32_0 : i32
    scf.if %4 {
      %c0_i32_2 = arith.constant 0 : i32
      %8 = arith.cmpi eq, %arg1, %c0_i32_2 : i32
      %9 = arith.extui %8 : i1 to i32
      %c0_i32_3 = arith.constant 0 : i32
      %10 = arith.cmpi ne, %9, %c0_i32_3 : i32
      scf.if %10 {
        %cst_18 = arith.constant 0.000000e+00 : f32
        %27 = vector.broadcast %cst_18 : f32 to vector<1x128xf32>
        %c0_19 = arith.constant 0 : index
        %c0_20 = arith.constant 0 : index
        %28 = vector.load %arg10[%c0_19, %c0_20] : memref<1x128xf32, #tpu.memory_space<vmem>>, vector<1x128xf32>
        tpu.vector_store %arg10[%c0_19, %c0_20], %27 {strides = array<i32>} : memref<1x128xf32, #tpu.memory_space<vmem>>, vector<1x128xf32>,
        %cst_21 = arith.constant 0.000000e+00 : f32
        %29 = vector.broadcast %cst_21 : f32 to vector<1x128xf32>
        %c0_22 = arith.constant 0 : index
        %c0_23 = arith.constant 0 : index
        %30 = vector.load %arg11[%c0_22, %c0_23] : memref<1x128xf32, #tpu.memory_space<vmem>>, vector<1x128xf32>
        tpu.vector_store %arg11[%c0_22, %c0_23], %29 {strides = array<i32>} : memref<1x128xf32, #tpu.memory_space<vmem>>, vector<1x128xf32>,
      } else {
      }
      %c0 = arith.constant 0 : index
      %c0_4 = arith.constant 0 : index
      %11 = vector.load %arg2[%c0, %c0_4] : memref<8x32xf32, #tpu.memory_space<vmem>>, vector<8x32xf32>
      %c0_5 = arith.constant 0 : index
      %c0_6 = arith.constant 0 : index
      %12 = vector.load %arg3[%c0_5, %c0_6] : memref<32x128xf32, #tpu.memory_space<vmem>>, vector<32x128xf32>
      %cst = arith.constant dense<0.000000e+00> : vector<8x128xf32>
      %13 = tpu.matmul %11, %12, %cst {dimension_numbers = #tpu.dot_dimension_numbers<[1], [0], [0], [1], [0, 0, 1, 1], [], []>} : vector<8x32xf32>, vector<32x128xf32>, vector<8x128xf32> -> vector<8x128xf32>
      %14 = arith.index_cast %1 : i32 to index
      %c0_7 = arith.constant 0 : index
      %15 = vector.load %arg9[%14, %c0_7] : memref<8x128xf32, #tpu.memory_space<vmem>>, vector<8x128xf32>
      tpu.vector_store %arg9[%14, %c0_7], %13 {strides = array<i32>} : memref<8x128xf32, #tpu.memory_space<vmem>>, vector<8x128xf32>,
      %c0_8 = arith.constant 0 : index
      %c0_9 = arith.constant 0 : index
      %16 = vector.load %arg10[%c0_8, %c0_9] : memref<1x128xf32, #tpu.memory_space<vmem>>, vector<1x128xf32>
      %cst_10 = arith.constant dense<0.000000e+00> : vector<128xf32>
      %17 = vector.multi_reduction <add>, %13, %cst_10 [0] : vector<8x128xf32> to vector<128xf32>
      %18 = vector.shape_cast %17 : vector<128xf32> to vector<1x128xf32>
      %19 = arith.addf %16, %18 : vector<1x128xf32>
      %c0_11 = arith.constant 0 : index
      %c0_12 = arith.constant 0 : index
      %20 = vector.load %arg10[%c0_11, %c0_12] : memref<1x128xf32, #tpu.memory_space<vmem>>, vector<1x128xf32>
      tpu.vector_store %arg10[%c0_11, %c0_12], %19 {strides = array<i32>} : memref<1x128xf32, #tpu.memory_space<vmem>>, vector<1x128xf32>,
      %c0_13 = arith.constant 0 : index
      %c0_14 = arith.constant 0 : index
      %21 = vector.load %arg11[%c0_13, %c0_14] : memref<1x128xf32, #tpu.memory_space<vmem>>, vector<1x128xf32>
      %22 = arith.mulf %13, %13 : vector<8x128xf32>
      %cst_15 = arith.constant dense<0.000000e+00> : vector<128xf32>
      %23 = vector.multi_reduction <add>, %22, %cst_15 [0] : vector<8x128xf32> to vector<128xf32>
      %24 = vector.shape_cast %23 : vector<128xf32> to vector<1x128xf32>
      %25 = arith.addf %21, %24 : vector<1x128xf32>
      %c0_16 = arith.constant 0 : index
      %c0_17 = arith.constant 0 : index
      %26 = vector.load %arg11[%c0_16, %c0_17] : memref<1x128xf32, #tpu.memory_space<vmem>>, vector<1x128xf32>
      tpu.vector_store %arg11[%c0_16, %c0_17], %25 {strides = array<i32>} : memref<1x128xf32, #tpu.memory_space<vmem>>, vector<1x128xf32>,
    } else {
    }
    %c1_i32 = arith.constant 1 : i32
    %5 = arith.cmpi eq, %arg0, %c1_i32 : i32
    %6 = arith.extui %5 : i1 to i32
    %c0_i32_1 = arith.constant 0 : i32
    %7 = arith.cmpi ne, %6, %c0_i32_1 : i32
    scf.if %7 {
      %c0_i32_2 = arith.constant 0 : i32
      %8 = arith.cmpi eq, %arg1, %c0_i32_2 : i32
      %9 = arith.extui %8 : i1 to i32
      %c0_i32_3 = arith.constant 0 : i32
      %10 = arith.cmpi ne, %9, %c0_i32_3 : i32
      scf.if %10 {
        %c0_15 = arith.constant 0 : index
        %c0_16 = arith.constant 0 : index
        %27 = vector.load %arg10[%c0_15, %c0_16] : memref<1x128xf32, #tpu.memory_space<vmem>>, vector<1x128xf32>
        %cst_17 = arith.constant 1.250000e-01 : f32
        %28 = vector.broadcast %cst_17 : f32 to vector<1x128xf32>
        %29 = arith.mulf %27, %28 : vector<1x128xf32>
        %c0_18 = arith.constant 0 : index
        %c0_19 = arith.constant 0 : index
        %30 = vector.load %arg11[%c0_18, %c0_19] : memref<1x128xf32, #tpu.memory_space<vmem>>, vector<1x128xf32>
        %cst_20 = arith.constant 1.250000e-01 : f32
        %31 = vector.broadcast %cst_20 : f32 to vector<1x128xf32>
        %32 = arith.mulf %30, %31 : vector<1x128xf32>
        %33 = arith.mulf %29, %29 : vector<1x128xf32>
        %34 = arith.subf %32, %33 : vector<1x128xf32>
        %cst_21 = arith.constant 0.000000e+00 : f32
        %35 = vector.broadcast %cst_21 : f32 to vector<1x128xf32>
        %36 = arith.maximumf %34, %35 : vector<1x128xf32>
        %c0_22 = arith.constant 0 : index
        %c0_23 = arith.constant 0 : index
        %37 = vector.load %arg4[%c0_22, %c0_23] : memref<1x128xf32, #tpu.memory_space<vmem>>, vector<1x128xf32>
        %cst_24 = arith.constant 9.99999974E-6 : f32
        %38 = vector.broadcast %cst_24 : f32 to vector<1x128xf32>
        %39 = arith.addf %36, %38 : vector<1x128xf32>
        %40 = math.rsqrt %39 : vector<1x128xf32>
        %41 = arith.mulf %37, %40 : vector<1x128xf32>
        %c0_25 = arith.constant 0 : index
        %c0_26 = arith.constant 0 : index
        %42 = vector.load %arg12[%c0_25, %c0_26] : memref<1x128xf32, #tpu.memory_space<vmem>>, vector<1x128xf32>
        tpu.vector_store %arg12[%c0_25, %c0_26], %41 {strides = array<i32>} : memref<1x128xf32, #tpu.memory_space<vmem>>, vector<1x128xf32>,
        %c0_27 = arith.constant 0 : index
        %c0_28 = arith.constant 0 : index
        %43 = vector.load %arg5[%c0_27, %c0_28] : memref<1x128xf32, #tpu.memory_space<vmem>>, vector<1x128xf32>
        %44 = arith.mulf %29, %41 : vector<1x128xf32>
        %45 = arith.subf %43, %44 : vector<1x128xf32>
        %c0_29 = arith.constant 0 : index
        %c0_30 = arith.constant 0 : index
        %46 = vector.load %arg13[%c0_29, %c0_30] : memref<1x128xf32, #tpu.memory_space<vmem>>, vector<1x128xf32>
        tpu.vector_store %arg13[%c0_29, %c0_30], %45 {strides = array<i32>} : memref<1x128xf32, #tpu.memory_space<vmem>>, vector<1x128xf32>,
      } else {
      }
      %11 = arith.index_cast %1 : i32 to index
      %c0 = arith.constant 0 : index
      %12 = vector.load %arg9[%11, %c0] : memref<8x128xf32, #tpu.memory_space<vmem>>, vector<8x128xf32>
      %c0_4 = arith.constant 0 : index
      %c0_5 = arith.constant 0 : index
      %13 = vector.load %arg12[%c0_4, %c0_5] : memref<1x128xf32, #tpu.memory_space<vmem>>, vector<1x128xf32>
      %14 = vector.broadcast %13 : vector<1x128xf32> to vector<8x128xf32>
      %15 = arith.mulf %12, %14 : vector<8x128xf32>
      %c0_6 = arith.constant 0 : index
      %c0_7 = arith.constant 0 : index
      %16 = vector.load %arg13[%c0_6, %c0_7] : memref<1x128xf32, #tpu.memory_space<vmem>>, vector<1x128xf32>
      %17 = vector.broadcast %16 : vector<1x128xf32> to vector<8x128xf32>
      %18 = arith.addf %15, %17 : vector<8x128xf32>
      %cst = arith.constant 0.000000e+00 : f32
      %19 = vector.broadcast %cst : f32 to vector<8x128xf32>
      %20 = arith.maximumf %18, %19 : vector<8x128xf32>
      %c0_8 = arith.constant 0 : index
      %c0_9 = arith.constant 0 : index
      %21 = vector.load %arg6[%c0_8, %c0_9] : memref<128x128xf32, #tpu.memory_space<vmem>>, vector<128x128xf32>
      %cst_10 = arith.constant dense<0.000000e+00> : vector<8x128xf32>
      %22 = tpu.matmul %20, %21, %cst_10 {dimension_numbers = #tpu.dot_dimension_numbers<[1], [0], [0], [1], [0, 0, 1, 1], [], []>} : vector<8x128xf32>, vector<128x128xf32>, vector<8x128xf32> -> vector<8x128xf32>
      %c0_11 = arith.constant 0 : index
      %c0_12 = arith.constant 0 : index
      %23 = vector.load %arg7[%c0_11, %c0_12] : memref<1x128xf32, #tpu.memory_space<vmem>>, vector<1x128xf32>
      %24 = vector.broadcast %23 : vector<1x128xf32> to vector<8x128xf32>
      %25 = arith.addf %22, %24 : vector<8x128xf32>
      %c0_13 = arith.constant 0 : index
      %c0_14 = arith.constant 0 : index
      %26 = vector.load %arg8[%c0_13, %c0_14] : memref<8x128xf32, #tpu.memory_space<vmem>>, vector<8x128xf32>
      tpu.vector_store %arg8[%c0_13, %c0_14], %25 {strides = array<i32>} : memref<8x128xf32, #tpu.memory_space<vmem>>, vector<8x128xf32>,
    } else {
    }
    return
  }
  func.func @transform_0(%arg0: i32, %arg1: i32) -> (i32, i32) {
    %c1_i32 = arith.constant 1 : i32
    %0 = arith.subi %c1_i32, %arg0 : i32
    %1 = arith.muli %arg1, %0 : i32
    %c0_i32 = arith.constant 0 : i32
    %c0_i32_0 = arith.constant 0 : i32
    return %1, %c0_i32 : i32, i32
  }
  func.func @transform_1(%arg0: i32, %arg1: i32) -> (i32, i32) {
    %c0_i32 = arith.constant 0 : i32
    %c0_i32_0 = arith.constant 0 : i32
    %c0_i32_1 = arith.constant 0 : i32
    return %c0_i32, %c0_i32_0 : i32, i32
  }
  func.func @transform_2(%arg0: i32, %arg1: i32) -> (i32, i32) {
    %c0_i32 = arith.constant 0 : i32
    %c0_i32_0 = arith.constant 0 : i32
    %c0_i32_1 = arith.constant 0 : i32
    return %c0_i32, %c0_i32_0 : i32, i32
  }
  func.func @transform_3(%arg0: i32, %arg1: i32) -> (i32, i32) {
    %c0_i32 = arith.constant 0 : i32
    %c0_i32_0 = arith.constant 0 : i32
    %c0_i32_1 = arith.constant 0 : i32
    return %c0_i32, %c0_i32_0 : i32, i32
  }
  func.func @transform_4(%arg0: i32, %arg1: i32) -> (i32, i32) {
    %c0_i32 = arith.constant 0 : i32
    %c0_i32_0 = arith.constant 0 : i32
    %c0_i32_1 = arith.constant 0 : i32
    return %c0_i32, %c0_i32_0 : i32, i32
  }
  func.func @transform_5(%arg0: i32, %arg1: i32) -> (i32, i32) {
    %c0_i32 = arith.constant 0 : i32
    %c0_i32_0 = arith.constant 0 : i32
    %c0_i32_1 = arith.constant 0 : i32
    return %c0_i32, %c0_i32_0 : i32, i32
  }
  func.func @transform_6(%arg0: i32, %arg1: i32) -> (i32, i32) {
    %0 = arith.muli %arg1, %arg0 : i32
    %c0_i32 = arith.constant 0 : i32
    %c0_i32_0 = arith.constant 0 : i32
    return %0, %c0_i32 : i32, i32
  }
}

</mosaic_0001>

<llo_original>
// kernel: tpu_custom_call.1
$region0: #{tpu_custom_call.1}
  #allocation0 [shape = 'u32[]', space=smem, size = 0x4, offset = 0x4, fixed_abs, tag = 'smem constant byte address 0x4 - core index']
  #allocation1 [shape = 'u32[144,128]{1,0:T(1,128)}', space=vmem, size = 0x12000, scoped, tag = 'internal scratch']
  #allocation2 [shape = 'f32[8,128]{1,0:T(8,128)}', space=vmem, size = 0x1000, scoped, tag = 'scratch operand']
  #allocation3 [shape = 'f32[1,128]{1,0:T(1,128)}', space=vmem, size = 0x200, scoped, tag = 'scratch operand']
  #allocation4 [shape = 'f32[1,128]{1,0:T(1,128)}', space=vmem, size = 0x200, scoped, tag = 'scratch operand']
  #allocation5 [shape = 'f32[1,128]{1,0:T(1,128)}', space=vmem, size = 0x200, scoped, tag = 'scratch operand']
  #allocation6 [shape = 'f32[1,128]{1,0:T(1,128)}', space=vmem, size = 0x200, scoped, tag = 'scratch operand']
  %s0 = inlined_call_operand.hbm [shape: f32[8,32], index: 0, kind: input, shape index: {}]
  %s1 = inlined_call_operand.hbm [shape: f32[32,128], index: 1, kind: input, shape index: {}]
  %s2 = inlined_call_operand.vmem [shape: f32[1,128], index: 2, kind: input, shape index: {}]
  %s3 = inlined_call_operand.vmem [shape: f32[1,128], index: 3, kind: input, shape index: {}]
  %s4 = inlined_call_operand.hbm [shape: f32[128,128], index: 4, kind: input, shape index: {}]
  %s5 = inlined_call_operand.vmem [shape: f32[1,128], index: 5, kind: input, shape index: {}]
  %s6 = inlined_call_operand.hbm [shape: f32[8,128], index: 6, kind: output, shape index: {}]
  %s7 = sld [smem:[#allocation0]]
  $region85: #{tpu_custom_call.1} parent=0
    _
  %s9 = ssub.s32 1, %s7
  %s10 = scalar_select 0, %s9, %s7
  $region1: #{tpu_custom_call.1} parent=0
    #allocation7 [shape = 'u8[8192]{0}', space=vmem, size = 0x2000, scoped, tag = 'input window, operand 0']
    #allocation8 [shape = 's32[2]{0}', space=sflag, size = 0x8, scoped, tag = 'scoped memory for tpu_custom_call.1']
    #allocation9 [shape = 's32[2]{0}', space=sflag, size = 0x8, scoped, tag = 'scoped memory for tpu_custom_call.1']
    #allocation10 [shape = 'u8[16384]{0}', space=vmem, size = 0x4000, scoped, tag = 'input window, operand 1, single buffered']
    #allocation11 [shape = 's32[1]{0}', space=sflag, size = 0x4, scoped, tag = 'scoped memory for tpu_custom_call.1']
    #allocation12 [shape = 'u8[65536]{0}', space=vmem, size = 0x10000, scoped, tag = 'input window, operand 4, single buffered']
    #allocation13 [shape = 'u8[8192]{0}', space=vmem, size = 0x2000, scoped, tag = 'output window, operand 0']
    %11 = vsyncpa [#allocation8], 0
    %s12 = scalar_lea.sflag [#allocation8], 1
    %13 = vsyncpa %s12, 0
    %14 = vsyncpa [#allocation11], 0
    %15 = vsyncpa [#allocation9], 0
    %s16 = scalar_lea.sflag [#allocation9], 1
    %17 = vsyncpa %s16, 0
    loop: start=0, step=1, limit=4
    $region2: #{tpu_custom_call.1} parent=1 // loop_pre_header
      _
    $region3: #{tpu_custom_call.1} parent=1 // loop_header
      %s19 = sphi 0, %s23
      %p20 = scmp.ge.s32.totalorder %s19, 4
      %s26 = sphi 0, %s38
      %s27 = sphi 0, %s34
      %s28 = sphi 0, %s26
      %s29 = sphi 0, %s27
      %s30 = sphi 0, %s28
      %s31 = sphi 0, %s29
      %s45 = sphi 0, %s47
      %s48 = sphi 0, %s45
      %s49 = sphi 0, %s48
      %s65 = sphi 0, %s49
      %s69 = sphi 0, %s69
      %s71 = sphi 0, %s69
      %s72 = sphi 0, %s71
      %s86 = sphi 0, %s72
      %s90 = sphi 0, %s90
      %s92 = sphi 0, %s90
      %s93 = sphi 0, %s92
      %s107 = sphi 0, %s93
      %s111 = sphi 0, %s111
      %s113 = sphi 0, %s111
      %s114 = sphi 0, %s113
      %s128 = sphi 0, %s114
      %s132 = sphi 0, %s132
      %s134 = sphi 0, %s132
      %s135 = sphi 0, %s134
      %s149 = sphi 0, %s135
      %s153 = sphi 0, %s153
      %s155 = sphi 0, %s153
      %s156 = sphi 0, %s155
      %s170 = sphi 0, %s156
      %s178 = sphi 0, %s180
      %s181 = sphi 0, %s178
      %s182 = sphi 0, %s181
      %s198 = sphi 0, %s182
    $region4: #{tpu_custom_call.1} parent=1 // loop_header_branch
      %22 = sbr.rel (%p20) target = $region8
    $region5: #{tpu_custom_call.1} parent=1 // loop_body
      %s24 = ssub.s32 %s19, 1
      %s25 = ssub.s32 %s19, 2
      %s32 = sadd.s32 1, %s27
      %p33 = scmp.ge.s32.totalorder %s32, 1
      %s34 = scalar_select %p33, 0, %s32
      %s35 = sadd.s32 1, %s26
      %s36 = scalar_select %p33, %s35, %s26
      %p37 = scmp.ge.s32.totalorder %s36, 2
      %s38 = scalar_select %p37, 0, %s36
      %s39 = ssub.s32 1, %s26
      %s40 = smul.u32 %s27, %s39
      %s41 = ssub.s32 1, %s38
      %s42 = smul.u32 %s34, %s41
      %s43 = ssub.s32 %s40, %s42
      %p44 = scmp.eq.s32.totalorder %s43, 0
      %s46 = sadd.s32 %s45, 1
      %s47 = scalar_select %p44, %s45, %s46
      %p50 = pneg %p44
      %p51 = scmp.eq.s32.totalorder %s19, 1
      %p52 = por %p50, %p51
      %p53 = scmp.ne.s32.totalorder %s45, %s48
      %p54 = scmp.eq.s32.totalorder %s19, 0
      %p55 = por %p53, %p54
      %p56 = scmp.ne.s32.totalorder %s45, %s48
      %p57 = scmp.eq.s32.totalorder %s24, 1
      %p58 = por %p56, %p57
      %p59 = scmp.ne.s32.totalorder %s48, %s49
      %p60 = scmp.eq.s32.totalorder %s24, 0
      %p61 = por %p59, %p60
      %p62 = scmp.ne.s32.totalorder %s48, %s49
      %p63 = scmp.eq.s32.totalorder %s25, 1
      %p64 = por %p62, %p63
      %p66 = scmp.ne.s32.totalorder %s49, %s65
      %p67 = scmp.eq.s32.totalorder %s25, 0
      %p68 = por %p66, %p67
      %s70 = sadd.s32 %s69, 1
      %p73 = scmp.eq.s32.totalorder %s19, 1
      %p74 = scmp.ne.s32.totalorder %s69, %s71
      %p75 = scmp.eq.s32.totalorder %s19, 0
      %p76 = por %p74, %p75
      %p77 = scmp.ne.s32.totalorder %s69, %s71
      %p78 = scmp.eq.s32.totalorder %s24, 1
      %p79 = por %p77, %p78
      %p80 = scmp.ne.s32.totalorder %s71, %s72
      %p81 = scmp.eq.s32.totalorder %s24, 0
      %p82 = por %p80, %p81
      %p83 = scmp.ne.s32.totalorder %s71, %s72
      %p84 = scmp.eq.s32.totalorder %s25, 1
      %p85 = por %p83, %p84
      %p87 = scmp.ne.s32.totalorder %s72, %s86
      %p88 = scmp.eq.s32.totalorder %s25, 0
      %p89 = por %p87, %p88
      %s91 = sadd.s32 %s90, 1
      %p94 = scmp.eq.s32.totalorder %s19, 1
      %p95 = scmp.ne.s32.totalorder %s90, %s92
      %p96 = scmp.eq.s32.totalorder %s19, 0
      %p97 = por %p95, %p96
      %p98 = scmp.ne.s32.totalorder %s90, %s92
      %p99 = scmp.eq.s32.totalorder %s24, 1
      %p100 = por %p98, %p99
      %p101 = scmp.ne.s32.totalorder %s92, %s93
      %p102 = scmp.eq.s32.totalorder %s24, 0
      %p103 = por %p101, %p102
      %p104 = scmp.ne.s32.totalorder %s92, %s93
      %p105 = scmp.eq.s32.totalorder %s25, 1
      %p106 = por %p104, %p105
      %p108 = scmp.ne.s32.totalorder %s93, %s107
      %p109 = scmp.eq.s32.totalorder %s25, 0
      %p110 = por %p108, %p109
      %s112 = sadd.s32 %s111, 1
      %p115 = scmp.eq.s32.totalorder %s19, 1
      %p116 = scmp.ne.s32.totalorder %s111, %s113
      %p117 = scmp.eq.s32.totalorder %s19, 0
      %p118 = por %p116, %p117
      %p119 = scmp.ne.s32.totalorder %s111, %s113
      %p120 = scmp.eq.s32.totalorder %s24, 1
      %p121 = por %p119, %p120
      %p122 = scmp.ne.s32.totalorder %s113, %s114
      %p123 = scmp.eq.s32.totalorder %s24, 0
      %p124 = por %p122, %p123
      %p125 = scmp.ne.s32.totalorder %s113, %s114
      %p126 = scmp.eq.s32.totalorder %s25, 1
      %p127 = por %p125, %p126
      %p129 = scmp.ne.s32.totalorder %s114, %s128
      %p130 = scmp.eq.s32.totalorder %s25, 0
      %p131 = por %p129, %p130
      %s133 = sadd.s32 %s132, 1
      %p136 = scmp.eq.s32.totalorder %s19, 1
      %p137 = scmp.ne.s32.totalorder %s132, %s134
      %p138 = scmp.eq.s32.totalorder %s19, 0
      %p139 = por %p137, %p138
      %p140 = scmp.ne.s32.totalorder %s132, %s134
      %p141 = scmp.eq.s32.totalorder %s24, 1
      %p142 = por %p140, %p141
      %p143 = scmp.ne.s32.totalorder %s134, %s135
      %p144 = scmp.eq.s32.totalorder %s24, 0
      %p145 = por %p143, %p144
      %p146 = scmp.ne.s32.totalorder %s134, %s135
      %p147 = scmp.eq.s32.totalorder %s25, 1
      %p148 = por %p146, %p147
      %p150 = scmp.ne.s32.totalorder %s135, %s149
      %p151 = scmp.eq.s32.totalorder %s25, 0
      %p152 = por %p150, %p151
      %s154 = sadd.s32 %s153, 1
      %p157 = scmp.eq.s32.totalorder %s19, 1
      %p158 = scmp.ne.s32.totalorder %s153, %s155
      %p159 = scmp.eq.s32.totalorder %s19, 0
      %p160 = por %p158, %p159
      %p161 = scmp.ne.s32.totalorder %s153, %s155
      %p162 = scmp.eq.s32.totalorder %s24, 1
      %p163 = por %p161, %p162
      %p164 = scmp.ne.s32.totalorder %s155, %s156
      %p165 = scmp.eq.s32.totalorder %s24, 0
      %p166 = por %p164, %p165
      %p167 = scmp.ne.s32.totalorder %s155, %s156
      %p168 = scmp.eq.s32.totalorder %s25, 1
      %p169 = por %p167, %p168
      %p171 = scmp.ne.s32.totalorder %s156, %s170
      %p172 = scmp.eq.s32.totalorder %s25, 0
      %p173 = por %p171, %p172
      %s174 = smul.u32 %s27, %s26
      %s175 = smul.u32 %s34, %s38
      %s176 = ssub.s32 %s174, %s175
      %p177 = scmp.eq.s32.totalorder %s176, 0
      %s179 = sadd.s32 %s178, 1
      %s180 = scalar_select %p177, %s178, %s179
      %p183 = pneg %p177
      %p184 = scmp.eq.s32.totalorder %s19, 1
      %p185 = por %p183, %p184
      %p186 = scmp.ne.s32.totalorder %s178, %s181
      %p187 = scmp.eq.s32.totalorder %s19, 0
      %p188 = por %p186, %p187
      %p189 = scmp.ne.s32.totalorder %s178, %s181
      %p190 = scmp.eq.s32.totalorder %s24, 1
      %p191 = por %p189, %p190
      %p192 = scmp.ne.s32.totalorder %s181, %s182
      %p193 = scmp.eq.s32.totalorder %s24, 0
      %p194 = por %p192, %p193
      %p195 = scmp.ne.s32.totalorder %s181, %s182
      %p196 = scmp.eq.s32.totalorder %s25, 1
      %p197 = por %p195, %p196
      %p199 = scmp.ne.s32.totalorder %s182, %s198
      %p200 = scmp.eq.s32.totalorder %s25, 0
      %p201 = por %p199, %p200
      %p202 = scmp.le.s32.totalorder 1, %s19
      %p203 = scmp.lt.s32.totalorder %s19, 3
      %p204 = pnand %p202, %p203
      %p205 = pneg %p204
      // Predicated region
      $region9: #{tpu_custom_call.1} parent=5 // pred_check
        _
      $region10: #{tpu_custom_call.1} parent=5 // pred_check_branch
        %207 = sbr.rel (%p204) target = $region12
      $region11: #{tpu_custom_call.1} parent=5 // pred_region
        %s208 = ssub.s32 %s19, 1
        // Predicated region
        $region13: #{tpu_custom_call.1} parent=11 // pred_check
          %p209 = pneg %p82
        $region14: #{tpu_custom_call.1} parent=11 // pred_check_branch
          %211 = sbr.rel (%p209) target = $region16
        $region15: #{tpu_custom_call.1} parent=11 // pred_region
          %s213 = ssub.s32 512, 512
          %214 = vsyncadd [#allocation11], %s213
          %s215 = sshll.u32 [#allocation10], 4
          %s216 = int_to_ptr.vmem [resolvable:$true] %s215
          %221 = dma.hbm_to_vmem [thread:$0]  %s1, 512, %s216, [#allocation11], 128, 128, 8
        $region16: #{tpu_custom_call.1} parent=11 // pred_fallthru
          _
        // Predicated region
        $region17: #{tpu_custom_call.1} parent=11 // pred_check
          %p222 = pneg %p103
        $region18: #{tpu_custom_call.1} parent=11 // pred_check_branch
          %224 = sbr.rel (%p222) target = $region20
        $region19: #{tpu_custom_call.1} parent=11 // pred_region
          _
        $region20: #{tpu_custom_call.1} parent=11 // pred_fallthru
          _
        // Predicated region
        $region21: #{tpu_custom_call.1} parent=11 // pred_check
          %p225 = pneg %p124
        $region22: #{tpu_custom_call.1} parent=11 // pred_check_branch
          %227 = sbr.rel (%p225) target = $region24
        $region23: #{tpu_custom_call.1} parent=11 // pred_region
          _
        $region24: #{tpu_custom_call.1} parent=11 // pred_fallthru
          _
        // Predicated region
        $region25: #{tpu_custom_call.1} parent=11 // pred_check
          %p228 = pneg %p145
        $region26: #{tpu_custom_call.1} parent=11 // pred_check_branch
          %230 = sbr.rel (%p228) target = $region28
        $region27: #{tpu_custom_call.1} parent=11 // pred_region
          %s232 = ssub.s32 2048, 2048
          %233 = vsyncadd [#allocation11], %s232
          %s234 = sshll.u32 [#allocation12], 4
          %s235 = int_to_ptr.vmem [resolvable:$true] %s234
          %240 = dma.hbm_to_vmem [thread:$0]  %s4, 2048, %s235, [#allocation11], 128, 128, 8
        $region28: #{tpu_custom_call.1} parent=11 // pred_fallthru
          _
        // Predicated region
        $region29: #{tpu_custom_call.1} parent=11 // pred_check
          %p241 = pneg %p166
        $region30: #{tpu_custom_call.1} parent=11 // pred_check_branch
          %243 = sbr.rel (%p241) target = $region32
        $region31: #{tpu_custom_call.1} parent=11 // pred_region
          _
        $region32: #{tpu_custom_call.1} parent=11 // pred_fallthru
          _
      $region12: #{tpu_custom_call.1} parent=5 // pred_fallthru
        _
      %p244 = scmp.lt.s32.totalorder %s19, 2
      // Predicated region
      $region33: #{tpu_custom_call.1} parent=5 // pred_check
        %p245 = pneg %p244
      $region34: #{tpu_custom_call.1} parent=5 // pred_check_branch
        %247 = sbr.rel (%p245) target = $region36
      $region35: #{tpu_custom_call.1} parent=5 // pred_region
        // Predicated region
        $region37: #{tpu_custom_call.1} parent=35 // pred_check
          %p248 = pneg %p55
        $region38: #{tpu_custom_call.1} parent=35 // pred_check_branch
          %250 = sbr.rel (%p248) target = $region40
        $region39: #{tpu_custom_call.1} parent=35 // pred_region
          %s251 = sand.u32 %s45, 1
          %s252 = scalar_lea.sflag [#allocation8], %s251
          %s253 = sand.u32 %s45, 1
          %s254 = smul.addr %s253, 8
          %s255 = scalar_lea.vmem [#allocation7], %s254
          %s256 = ssub.s32 1, %s26
          %s257 = smul.u32 %s27, %s256
          %s259 = ssub.s32 128, 128
          %260 = vsyncadd %s252, %s259
          %s261 = smul.addr %s257, 128
          %s262 = scalar_lea.hbm %s0, %s261
          %s264 = sshll.u32 %s255, 4
          %s265 = int_to_ptr.vmem [resolvable:$true] %s264
          %267 = dma.hbm_to_vmem [thread:$0]  %s262, 128, %s265, %s252
        $region40: #{tpu_custom_call.1} parent=35 // pred_fallthru
          _
      $region36: #{tpu_custom_call.1} parent=5 // pred_fallthru
        _
      %p268 = scmp.le.s32.totalorder 1, %s19
      %p269 = scmp.lt.s32.totalorder %s19, 3
      %p270 = pnand %p268, %p269
      %p271 = pneg %p270
      // Predicated region
      $region41: #{tpu_custom_call.1} parent=5 // pred_check
        _
      $region42: #{tpu_custom_call.1} parent=5 // pred_check_branch
        %273 = sbr.rel (%p270) target = $region44
      $region43: #{tpu_custom_call.1} parent=5 // pred_region
        %s274 = ssub.s32 %s19, 1
        %s275 = sand.u32 %s48, 1
        %s276 = scalar_lea.sflag [#allocation8], %s275
        %s277 = sand.u32 %s48, 1
        %s278 = smul.addr %s277, 8
        %s279 = scalar_lea.vmem [#allocation7], %s278
        // Predicated region
        $region45: #{tpu_custom_call.1} parent=43 // pred_check
          %p280 = pneg %p61
        $region46: #{tpu_custom_call.1} parent=43 // pred_check_branch
          %282 = sbr.rel (%p280) target = $region48
        $region47: #{tpu_custom_call.1} parent=43 // pred_region
          %283 = dma.done %s276, 128
        $region48: #{tpu_custom_call.1} parent=43 // pred_fallthru
          _
        // Predicated region
        $region49: #{tpu_custom_call.1} parent=43 // pred_check
          %p284 = pneg %p82
        $region50: #{tpu_custom_call.1} parent=43 // pred_check_branch
          %286 = sbr.rel (%p284) target = $region52
        $region51: #{tpu_custom_call.1} parent=43 // pred_region
          %287 = dma.done [#allocation11], 512
        $region52: #{tpu_custom_call.1} parent=43 // pred_fallthru
          _
        // Predicated region
        $region53: #{tpu_custom_call.1} parent=43 // pred_check
          %p288 = pneg %p145
        $region54: #{tpu_custom_call.1} parent=43 // pred_check_branch
          %290 = sbr.rel (%p288) target = $region56
        $region55: #{tpu_custom_call.1} parent=43 // pred_region
          %291 = dma.done [#allocation11], 2048
        $region56: #{tpu_custom_call.1} parent=43 // pred_fallthru
          _
        %s292 = sand.u32 %s48, 1
        %s293 = scalar_lea.sflag [#allocation8], %s292
        %s294 = sand.u32 %s48, 1
        %s295 = smul.addr %s294, 8
        %s296 = scalar_lea.vmem [#allocation7], %s295
        %p297 = pneg %p61
        %p298 = pneg %p58
        %p299 = pneg %p82
        %p300 = pneg %p79
        %p301 = pneg %p103
        %p302 = pneg %p100
        %p303 = pneg %p124
        %p304 = pneg %p121
        %p305 = pneg %p145
        %p306 = pneg %p142
        %p307 = pneg %p166
        %p308 = pneg %p163
        %p309 = pneg %p194
        %p310 = pneg %p191
        %s311 = sand.u32 %s181, 1
        %s312 = scalar_lea.sflag [#allocation9], %s311
        %s313 = sand.u32 %s181, 1
        %s314 = smul.addr %s313, 8
        %s315 = scalar_lea.vmem [#allocation13], %s314
        %s316 = ssub.s32 1, %s28
        %s317 = smul.u32 %s29, %s316
        %s318 = smul.u32 %s29, %s28
        %s319 = smul.u32 %s29, 8
        %p320 = scmp.eq.s32.totalorder %s28, 0
        // Predicated region
        $region57: #{tpu_custom_call.1} parent=43 // pred_check
          %p321 = pneg %p320
        $region58: #{tpu_custom_call.1} parent=43 // pred_check_branch
          %323 = sbr.rel (%p321) target = $region60
        $region59: #{tpu_custom_call.1} parent=43 // pred_region
          %p324 = scmp.eq.s32.totalorder %s29, 0
          // Predicated region
          $region61: #{tpu_custom_call.1} parent=59 // pred_check
            %p325 = pneg %p324
          $region62: #{tpu_custom_call.1} parent=59 // pred_check_branch
            %327 = sbr.rel (%p325) target = $region64
          $region63: #{tpu_custom_call.1} parent=59 // pred_region
            %328 = vst [vmem:[#allocation3] sm:$0x1] 0.0
            %329 = vst [vmem:[#allocation4] sm:$0x1] 0.0
          $region64: #{tpu_custom_call.1} parent=59 // pred_fallthru
            _
          %v330 = vld [vmem:[%s279] sm:$0xff]
          %v331 = vld [vmem:[#allocation10] sm:$0xff]
          %v332 = vld [vmem:[#allocation10 + $0x8] sm:$0xff]
          %v333 = vld [vmem:[#allocation10 + $0x10] sm:$0xff]
          %v334 = vld [vmem:[#allocation10 + $0x18] sm:$0xff]
          %vm335 = vcmask 261120
          %v337 = vsel %vm335, %v330, 0
          %339 = vmatprep.subr.mxu0 0.0
          %340 = vmatpush1.msra.mxu0 %v331
          %341 = vmatprep.subr.mxu0 0.0
          %342 = vmatpush1.msra.mxu0 %v332
          %343 = vmatprep.subr.mxu0 0.0
          %344 = vmatpush1.msra.mxu0 %v333
          %345 = vmatprep.subr.mxu0 0.0
          %346 = vmatpush1.msra.mxu0 %v334
          %347 = vmatprep.subr.mxu0 0.0
          %348 = vmatpush1.msra.mxu0 0.0
          %349 = vmatprep.subr.mxu0 0.0
          %350 = vmatpush1.msra.mxu0 0.0
          %351 = vmatprep.subr.mxu0 0.0
          %352 = vmatpush1.msra.mxu0 0.0
          %353 = vmatprep.subr.mxu0 0.0
          %354 = vmatpush1.msra.mxu0 0.0
          %355 = vmatprep.subr.mxu0 0.0
          %356 = vmatpush1.msra.mxu0 0.0
          %357 = vmatprep.subr.mxu0 0.0
          %358 = vmatpush1.msra.mxu0 0.0
          %359 = vmatprep.subr.mxu0 0.0
          %360 = vmatpush1.msra.mxu0 0.0
          %361 = vmatprep.subr.mxu0 0.0
          %362 = vmatpush1.msra.mxu0 0.0
          %363 = vmatprep.subr.mxu0 0.0
          %364 = vmatpush1.msra.mxu0 0.0
          %365 = vmatprep.subr.mxu0 0.0
          %366 = vmatpush1.msra.mxu0 0.0
          %367 = vmatprep.subr.mxu0 0.0
          %368 = vmatpush1.msra.mxu0 0.0
          %369 = vmatprep.subr.mxu0 0.0
          %370 = vmatpush1.msra.mxu0 0.0
          %371 = vmatprep.subr.mxu0 0.0
          %372 = vmatpush1.msra.mxu0 0.0
          %373 = vmatprep.subr.mxu0 0.0
          %374 = vmatpush1.msra.mxu0 0.0
          %375 = vmatprep.subr.mxu0 0.0
          %376 = vmatpush1.msra.mxu0 0.0
          %377 = vmatprep.subr.mxu0 0.0
          %378 = vmatpush1.msra.mxu0 0.0
          %379 = vmatprep.subr.mxu0 0.0
          %380 = vmatpush1.msra.mxu0 0.0
          %381 = vmatprep.subr.mxu0 0.0
          %382 = vmatpush1.msra.mxu0 0.0
          %383 = vmatprep.subr.mxu0 0.0
          %384 = vmatpush1.msra.mxu0 0.0
          %385 = vmatprep.subr.mxu0 0.0
          %386 = vmatpush1.msra.mxu0 0.0
          %387 = vmatprep.subr.mxu0 0.0
          %388 = vmatpush1.msra.mxu0 0.0
          %389 = vmatprep.subr.mxu0 0.0
          %390 = vmatpush1.msra.mxu0 0.0
          %391 = vmatprep.subr.mxu0 0.0
          %392 = vmatpush1.msra.mxu0 0.0
          %393 = vmatprep.subr.mxu0 0.0
          %394 = vmatpush1.msra.mxu0 0.0
          %395 = vmatprep.subr.mxu0 0.0
          %396 = vmatpush1.msra.mxu0 0.0
          %397 = vmatprep.subr.mxu0 0.0
          %398 = vmatpush1.msra.mxu0 0.0
          %399 = vmatprep.subr.mxu0 0.0
          %400 = vmatpush1.msra.mxu0 0.0
          %401 = vmatprep.subr.mxu0 0.0
          %402 = vmatpush1.msra.mxu0 0.0
          %403 = vmatprep.mubr.f32.mxu0 0.0
          %404 = vmatmul.mubr.f32.gmra.mrb[0].mxu0 %v337
          %v405 = vpop.f32.mrb[0].mxu0
          %v406 = vadd.f32 0.0, %v405
          %v407 = vpop.f32.mrb[0].mxu0
          %408 = vdwg.mxu0
          %s409 = scalar_lea.vmem [#allocation2], %s319
          %410 = vst [vmem:[%s409] sm:$0xff] %v406
          %v411 = vld [vmem:[#allocation3] sm:$0x1]
          %v412 = vrot.slane %v406, 4
          %v413 = vadd.f32 %v406, %v412
          %v414 = vrot.slane %v413, 2
          %v415 = vadd.f32 %v413, %v414
          %v416 = vrot.slane %v415, 1
          %v417 = vadd.f32 %v415, %v416
          %v418 = vadd.f32 %v411, %v417
          %419 = vst [vmem:[#allocation3] sm:$0x1] %v418
          %v420 = vld [vmem:[#allocation4] sm:$0x1]
          %v421 = vmul.f32 %v406, %v406
          %v422 = vrot.slane %v421, 4
          %v423 = vadd.f32 %v421, %v422
          %v424 = vrot.slane %v423, 2
          %v425 = vadd.f32 %v423, %v424
          %v426 = vrot.slane %v425, 1
          %v427 = vadd.f32 %v425, %v426
          %v428 = vadd.f32 %v420, %v427
          %429 = vst [vmem:[#allocation4] sm:$0x1] %v428
        $region60: #{tpu_custom_call.1} parent=43 // pred_fallthru
          _
        %p430 = scmp.eq.s32.totalorder %s28, 1
        // Predicated region
        $region65: #{tpu_custom_call.1} parent=43 // pred_check
          %p431 = pneg %p430
        $region66: #{tpu_custom_call.1} parent=43 // pred_check_branch
          %433 = sbr.rel (%p431) target = $region68
        $region67: #{tpu_custom_call.1} parent=43 // pred_region
          %p434 = scmp.eq.s32.totalorder %s29, 0
          // Predicated region
          $region69: #{tpu_custom_call.1} parent=67 // pred_check
            %p435 = pneg %p434
          $region70: #{tpu_custom_call.1} parent=67 // pred_check_branch
            %437 = sbr.rel (%p435) target = $region72
          $region71: #{tpu_custom_call.1} parent=67 // pred_region
            %v438 = vld [vmem:[#allocation3] sm:$0x1]
            %v439 = vmul.f32 %v438, 0.125
            %v440 = vld [vmem:[#allocation4] sm:$0x1]
            %v441 = vmul.f32 %v440, 0.125
            %v442 = vmul.f32 %v439, %v439
            %v443 = vsub.f32 %v441, %v442
            %v444 = vmax.f32 %v443, 0.0
            %v445 = vld [vmem:[%s2] sm:$0x1]
            %v446 = vadd.f32 %v444, 1e-05
            %v447 = vrsqrt.pop %v446
            %v448 = vmul.f32 %v445, %v447
            %449 = vst [vmem:[#allocation5] sm:$0x1] %v448
            %v450 = vld [vmem:[%s3] sm:$0x1]
            %v451 = vmul.f32 %v439, %v448
            %v452 = vsub.f32 %v450, %v451
            %453 = vst [vmem:[#allocation6] sm:$0x1] %v452
          $region72: #{tpu_custom_call.1} parent=67 // pred_fallthru
            _
          %s454 = scalar_lea.vmem [#allocation2], %s319
          %v455 = vld [vmem:[%s454] sm:$0xff]
          %v456 = vld [vmem:[#allocation5] sm:$0x1]
          %v458 = vlaneseq
          %v459 = vshrl.u32 %v458, 7
          %v460 = vsub.s32 0, %v459
          %v461 = vrot.slane %v456, %v460
          %v463 = vmul.f32 %v455, %v461
          %v464 = vld [vmem:[#allocation6] sm:$0x1]
          %v466 = vlaneseq
          %v467 = vshrl.u32 %v466, 7
          %v468 = vsub.s32 0, %v467
          %v469 = vrot.slane %v464, %v468
          %v471 = vadd.f32 %v463, %v469
          %v472 = vmax.f32 %v471, 0.0
          %v473 = vld [vmem:[#allocation12] sm:$0xff]
          %v474 = vld [vmem:[#allocation12 + $0x8] sm:$0xff]
          %v475 = vld [vmem:[#allocation12 + $0x10] sm:$0xff]
          %v476 = vld [vmem:[#allocation12 + $0x18] sm:$0xff]
          %v477 = vld [vmem:[#allocation12 + $0x20] sm:$0xff]
          %v478 = vld [vmem:[#allocation12 + $0x28] sm:$0xff]
          %v479 = vld [vmem:[#allocation12 + $0x30] sm:$0xff]
          %v480 = vld [vmem:[#allocation12 + $0x38] sm:$0xff]
          %v481 = vld [vmem:[#allocation12 + $0x40] sm:$0xff]
          %v482 = vld [vmem:[#allocation12 + $0x48] sm:$0xff]
          %v483 = vld [vmem:[#allocation12 + $0x50] sm:$0xff]
          %v484 = vld [vmem:[#allocation12 + $0x58] sm:$0xff]
          %v485 = vld [vmem:[#allocation12 + $0x60] sm:$0xff]
          %v486 = vld [vmem:[#allocation12 + $0x68] sm:$0xff]
          %v487 = vld [vmem:[#allocation12 + $0x70] sm:$0xff]
          %v488 = vld [vmem:[#allocation12 + $0x78] sm:$0xff]
          %v489 = vld [vmem:[%s5] sm:$0x1]
          %v491 = vlaneseq
          %v492 = vshrl.u32 %v491, 7
          %v493 = vsub.s32 0, %v492
          %v494 = vrot.slane %v489, %v493
          %496 = vmatprep.subr.mxu0 0.0
          %497 = vmatpush1.msra.mxu0 %v473
          %498 = vmatprep.subr.mxu0 0.0
          %499 = vmatpush1.msra.mxu0 %v474
          %500 = vmatprep.subr.mxu0 0.0
          %501 = vmatpush1.msra.mxu0 %v475
          %502 = vmatprep.subr.mxu0 0.0
          %503 = vmatpush1.msra.mxu0 %v476
          %504 = vmatprep.subr.mxu0 0.0
          %505 = vmatpush1.msra.mxu0 %v477
          %506 = vmatprep.subr.mxu0 0.0
          %507 = vmatpush1.msra.mxu0 %v478
          %508 = vmatprep.subr.mxu0 0.0
          %509 = vmatpush1.msra.mxu0 %v479
          %510 = vmatprep.subr.mxu0 0.0
          %511 = vmatpush1.msra.mxu0 %v480
          %512 = vmatprep.subr.mxu0 0.0
          %513 = vmatpush1.msra.mxu0 %v481
          %514 = vmatprep.subr.mxu0 0.0
          %515 = vmatpush1.msra.mxu0 %v482
          %516 = vmatprep.subr.mxu0 0.0
          %517 = vmatpush1.msra.mxu0 %v483
          %518 = vmatprep.subr.mxu0 0.0
          %519 = vmatpush1.msra.mxu0 %v484
          %520 = vmatprep.subr.mxu0 0.0
          %521 = vmatpush1.msra.mxu0 %v485
          %522 = vmatprep.subr.mxu0 0.0
          %523 = vmatpush1.msra.mxu0 %v486
          %524 = vmatprep.subr.mxu0 0.0
          %525 = vmatpush1.msra.mxu0 %v487
          %526 = vmatprep.subr.mxu0 0.0
          %527 = vmatpush1.msra.mxu0 %v488
          %528 = vmatprep.subr.mxu0 0.0
          %529 = vmatpush1.msra.mxu0 0.0
          %530 = vmatprep.subr.mxu0 0.0
          %531 = vmatpush1.msra.mxu0 0.0
          %532 = vmatprep.subr.mxu0 0.0
          %533 = vmatpush1.msra.mxu0 0.0
          %534 = vmatprep.subr.mxu0 0.0
          %535 = vmatpush1.msra.mxu0 0.0
          %536 = vmatprep.subr.mxu0 0.0
          %537 = vmatpush1.msra.mxu0 0.0
          %538 = vmatprep.subr.mxu0 0.0
          %539 = vmatpush1.msra.mxu0 0.0
          %540 = vmatprep.subr.mxu0 0.0
          %541 = vmatpush1.msra.mxu0 0.0
          %542 = vmatprep.subr.mxu0 0.0
          %543 = vmatpush1.msra.mxu0 0.0
          %544 = vmatprep.subr.mxu0 0.0
          %545 = vmatpush1.msra.mxu0 0.0
          %546 = vmatprep.subr.mxu0 0.0
          %547 = vmatpush1.msra.mxu0 0.0
          %548 = vmatprep.subr.mxu0 0.0
          %549 = vmatpush1.msra.mxu0 0.0
          %550 = vmatprep.subr.mxu0 0.0
          %551 = vmatpush1.msra.mxu0 0.0
          %552 = vmatprep.subr.mxu0 0.0
          %553 = vmatpush1.msra.mxu0 0.0
          %554 = vmatprep.subr.mxu0 0.0
          %555 = vmatpush1.msra.mxu0 0.0
          %556 = vmatprep.subr.mxu0 0.0
          %557 = vmatpush1.msra.mxu0 0.0
          %558 = vmatprep.subr.mxu0 0.0
          %559 = vmatpush1.msra.mxu0 0.0
          %560 = vmatprep.mubr.f32.mxu0 0.0
          %561 = vmatmul.mubr.f32.gmra.mrb[0].mxu0 %v472
          %v562 = vpop.f32.mrb[0].mxu0
          %v563 = vadd.f32 %v494, %v562
          %v564 = vpop.f32.mrb[0].mxu0
          %565 = vdwg.mxu0
          %566 = vst [vmem:[%s315] sm:$0xff] %v563
        $region68: #{tpu_custom_call.1} parent=43 // pred_fallthru
          _
        %s567 = sand.u32 %s181, 1
        %s568 = scalar_lea.sflag [#allocation9], %s567
        %s569 = sand.u32 %s181, 1
        %s570 = smul.addr %s569, 8
        %s571 = scalar_lea.vmem [#allocation13], %s570
        // Predicated region
        $region73: #{tpu_custom_call.1} parent=43 // pred_check
          %p572 = pneg %p191
        $region74: #{tpu_custom_call.1} parent=43 // pred_check_branch
          %574 = sbr.rel (%p572) target = $region76
        $region75: #{tpu_custom_call.1} parent=43 // pred_region
          %s575 = smul.u32 %s29, %s28
          %s577 = ssub.s32 128, 128
          %578 = vsyncadd %s568, %s577
          %s579 = smul.addr %s575, 128
          %s580 = scalar_lea.hbm %s6, %s579
          %s582 = sshll.u32 %s571, 4
          %s583 = int_to_ptr.vmem [resolvable:$true] %s582
          %585 = dma.vmem_to_hbm [thread:$0]  %s583, 128, %s580, %s568
        $region76: #{tpu_custom_call.1} parent=43 // pred_fallthru
          _
      $region44: #{tpu_custom_call.1} parent=5 // pred_fallthru
        _
      %p586 = scmp.le.s32.totalorder 2, %s19
      // Predicated region
      $region77: #{tpu_custom_call.1} parent=5 // pred_check
        %p587 = pneg %p586
      $region78: #{tpu_custom_call.1} parent=5 // pred_check_branch
        %589 = sbr.rel (%p587) target = $region80
      $region79: #{tpu_custom_call.1} parent=5 // pred_region
        %s590 = ssub.s32 %s19, 2
        // Predicated region
        $region81: #{tpu_custom_call.1} parent=79 // pred_check
          %p591 = pneg %p197
        $region82: #{tpu_custom_call.1} parent=79 // pred_check_branch
          %593 = sbr.rel (%p591) target = $region84
        $region83: #{tpu_custom_call.1} parent=79 // pred_region
          %s594 = sand.u32 %s182, 1
          %s595 = scalar_lea.sflag [#allocation9], %s594
          %s596 = sand.u32 %s182, 1
          %s597 = smul.addr %s596, 8
          %s598 = scalar_lea.vmem [#allocation13], %s597
          %599 = dma.done %s595, 128
        $region84: #{tpu_custom_call.1} parent=79 // pred_fallthru
          _
      $region80: #{tpu_custom_call.1} parent=5 // pred_fallthru
        _
    $region6: #{tpu_custom_call.1} parent=1 // loop_footer
      %s23 = sadd.s32 1, %s19
    $region7: #{tpu_custom_call.1} parent=1 // loop_footer_branch
      %18 = sbr.rel target = $region3
    $region8: #{tpu_custom_call.1} parent=1 // loop_exit
      _
    %600 = vsyncpa [#allocation8], 1
    %s601 = scalar_lea.sflag [#allocation8], 1
    %602 = vsyncpa %s601, 1
    %603 = vsyncpa [#allocation11], 1
    %604 = vsyncpa [#allocation9], 1
    %s605 = scalar_lea.sflag [#allocation9], 1
    %606 = vsyncpa %s605, 1

</llo_original>
